<compile_context>
chip_gen: v7x
topology: tpu7x:2x2x1
jax: 0.10.0
libtpu: 0.0.40
codegen_flags: <defaults>
</compile_context>

<pallas_src>
import functools

import jax
import jax.numpy as jnp
import numpy as np
from jax.experimental import pallas as pl
from jax.experimental.pallas import tpu as pltpu


def _attention_kernel(x_ref, wqkv_ref, bqkv_ref, wo_ref, bo_ref, o_ref, *,
                      n_heads, d_k, batch_tile):
    # x_ref    : (Bt, S, C) f32   batch_tile elements (raw memory reshape of NCHW)
    # wqkv_ref : (C, 3*h*d_k) bf16  fused per-head q/k/v weights (scale folded into q)
    # bqkv_ref : (1, 3*h*d_k) f32   fused q/k/v bias (scale folded into q part)
    # wo_ref   : (h, d_k, C) bf16   per-head output-projection weights
    # bo_ref   : (C, 1) f32         output-projection bias (column vector)
    # o_ref    : (Bt, C, S) f32     transposed output block
    for bi in range(batch_tile):               # static unroll, batch_tile is tiny
        x = x_ref[bi]                          # (S, C) f32
        xb = x.astype(jnp.bfloat16)

        # One fused projection matmul for all heads and q/k/v (wide N on the MXU).
        qkv = jnp.dot(xb, wqkv_ref[...],
                      preferred_element_type=jnp.float32) + bqkv_ref[...]  # (S, 3*h*d_k)

        # Transposed f32 accumulator: residual x^T + output bias, shape (C, S).
        # (XLU transpose; the whole residual path stays full-precision f32.)
        acc_t = jnp.transpose(x) + bo_ref[...]                             # (C, S)

        # n_heads is tiny -> static unroll.  For n_heads >~ 4 switch to
        # lax.fori_loop(unroll=True) or a trailing grid axis to bound live ranges.
        for h in range(n_heads):
            base = 3 * d_k * h
            q = qkv[:, base:base + d_k]                                    # (S, d_k)
            k = qkv[:, base + d_k:base + 2 * d_k]
            v = qkv[:, base + 2 * d_k:base + 3 * d_k]

            # logits = q @ k^T : contract last dims of both (trans_b), no k.T temp.
            logits = jax.lax.dot_general(
                q.astype(jnp.bfloat16), k.astype(jnp.bfloat16),
                dimension_numbers=(((1,), (1,)), ((), ())),
                preferred_element_type=jnp.float32)                        # (S, S)

            # Softmax over keys, f32 (scale already folded into q).
            m = jnp.max(logits, axis=-1, keepdims=True)
            p = jnp.exp(logits - m)
            denom = jnp.sum(p, axis=-1, keepdims=True)
            p = p * pl.reciprocal(denom, approx=True)                      # EUP

            head_out = jnp.dot(p.astype(jnp.bfloat16), v.astype(jnp.bfloat16),
                               preferred_element_type=jnp.float32)         # (S, d_k)

            # Per-head output projection, accumulated directly in transposed
            # form: contract wo_h dim 0 (d_k) with head_out dim 1 (d_k) -> (C, S).
            acc_t = acc_t + jax.lax.dot_general(
                wo_ref[h], head_out.astype(jnp.bfloat16),
                dimension_numbers=(((0,), (1,)), ((), ())),
                preferred_element_type=jnp.float32)

        o_ref[bi] = acc_t


def prepare_attention_params(w_proj_t, b_proj, w_out_t, b_out, *, n_heads, d_k):
    """One-time host-side weight re-layout (call at parameter-load time).

    w_proj_t : (C, n_heads*3*d_k)  projection Linear weight, pre-transposed
    b_proj   : (n_heads*3*d_k,)
    w_out_t  : (n_heads*d_k, C)    output Linear weight, pre-transposed
    b_out    : (C,)
    """
    C = w_proj_t.shape[0]
    scale = float(d_k) ** (-0.5)
    # Column order of w_proj_t is head-major, then [q | k | v] blocks of d_k.
    qkv_scale = jnp.array([scale, 1.0, 1.0], dtype=jnp.float32)
    wp = w_proj_t.reshape(C, n_heads, 3, d_k) * qkv_scale[None, None, :, None]
    wqkv = wp.reshape(C, n_heads * 3 * d_k).astype(jnp.bfloat16)
    bp = b_proj.reshape(n_heads, 3, d_k) * qkv_scale[None, :, None]
    bqkv = bp.reshape(1, n_heads * 3 * d_k).astype(jnp.float32)
    wo = w_out_t.reshape(n_heads, d_k, C).astype(jnp.bfloat16)
    bo = b_out.reshape(C, 1).astype(jnp.float32)
    return wqkv, bqkv, wo, bo


def _pick_batch_tile(B, max_tile=8):
    """Largest divisor of B (<= max_tile) that still leaves >= 2 grid steps
    (so v7x's two TensorCores both get work); B == 1 -> 1."""
    best = 1
    for bt in range(1, min(B, max_tile) + 1):
        if B % bt == 0 and B // bt >= 2:
            best = bt
    return best


def attention_block(x_nchw, wqkv, bqkv, wo, bo, *, n_heads, d_k):
    """x_nchw: (B, C, H, W) float32 -> (B, C, H, W) float32."""
    B, C, H, W = x_nchw.shape
    S = H * W
    hd3 = 3 * n_heads * d_k

    # Pure memory reshape (matches torch's x.reshape(B, H*W, -1), NO permute).
    x_seq = x_nchw.reshape(B, S, C)

    bt = _pick_batch_tile(B)
    kernel = functools.partial(_attention_kernel, n_heads=n_heads, d_k=d_k,
                               batch_tile=bt)

    out_cs = pl.pallas_call(
        kernel,
        out_shape=jax.ShapeDtypeStruct((B, C, S), jnp.float32),
        grid_spec=pltpu.PrefetchScalarGridSpec(
            num_scalar_prefetch=0,
            grid=(B // bt,),
            in_specs=[
                pl.BlockSpec((bt, S, C), lambda b: (b, 0, 0)),
                pl.BlockSpec((C, hd3), lambda b: (0, 0)),
                pl.BlockSpec((1, hd3), lambda b: (0, 0)),
                pl.BlockSpec((n_heads, d_k, C), lambda b: (0, 0, 0)),
                pl.BlockSpec((C, 1), lambda b: (0, 0)),
            ],
            out_specs=pl.BlockSpec((bt, C, S), lambda b: (b, 0, 0)),
        ),
        compiler_params=pltpu.CompilerParams(
            dimension_semantics=("parallel",),
            vmem_limit_bytes=32 * 1024 * 1024),
    )(x_seq, wqkv, bqkv, wo, bo)

    # (B, C, S) is already NCHW memory order -> pure reshape, no HBM transpose.
    return out_cs.reshape(B, C, H, W)


def _reference(x_nchw, w_proj_t, b_proj, w_out_t, b_out, n_heads, d_k):
    """Pure-JAX (f32) replica of the PyTorch forward for verification."""
    B, C, H, W = x_nchw.shape
    S = H * W
    scale = float(d_k) ** (-0.5)
    x = x_nchw.reshape(B, S, C)
    qkv = x @ w_proj_t + b_proj                       # (B, S, 3*h*d_k)
    qkv = qkv.reshape(B, S, n_heads, 3 * d_k)
    q, k, v = qkv[..., :d_k], qkv[..., d_k:2 * d_k], qkv[..., 2 * d_k:]
    attn = jnp.einsum('bihd,bjhd->bijh', q, k) * scale
    attn = jax.nn.softmax(attn, axis=2)
    res = jnp.einsum('bijh,bjhd->bihd', attn, v)
    res = res.reshape(B, S, n_heads * d_k)
    res = res @ w_out_t + b_out
    res = res + x
    return res.transpose(0, 2, 1).reshape(B, C, H, W)


if __name__ == "__main__":
    # Module hyperparameters (n_groups=32 belongs to the unused GroupNorm).
    n_channels = 32
    n_heads = 2
    d_k = 16
    B, H, W = 2, 8, 8

    key = jax.random.PRNGKey(0)
    kx, kwp, kbp, kwo, kbo = jax.random.split(key, 5)

    x = jax.random.normal(kx, (B, n_channels, H, W), dtype=jnp.float32)

    # Deterministic synthetic parameters (nn.Linear shapes, stored pre-transposed):
    #   projection: Linear(n_channels, n_heads*d_k*3)
    #   output    : Linear(n_heads*d_k, n_channels)
    w_proj_t = 0.05 * jax.random.normal(
        kwp, (n_channels, n_heads * d_k * 3), dtype=jnp.float32)
    b_proj = 0.01 * jax.random.normal(
        kbp, (n_heads * d_k * 3,), dtype=jnp.float32)
    w_out_t = 0.05 * jax.random.normal(
        kwo, (n_heads * d_k, n_channels), dtype=jnp.float32)
    b_out = 0.01 * jax.random.normal(kbo, (n_channels,), dtype=jnp.float32)

    # Weight re-layout done ONCE, outside the per-forward path.
    params = prepare_attention_params(w_proj_t, b_proj, w_out_t, b_out,
                                      n_heads=n_heads, d_k=d_k)
    params = jax.tree_util.tree_map(jax.block_until_ready, params)

    fwd = jax.jit(functools.partial(attention_block, n_heads=n_heads, d_k=d_k))
    out = jax.block_until_ready(fwd(x, *params))

    ref = _reference(x, w_proj_t, b_proj, w_out_t, b_out, n_heads, d_k)
    # bf16 MXU operands + approx reciprocal -> relaxed tolerance vs f32 ref.
    np.testing.assert_allclose(np.asarray(out), np.asarray(ref),
                               rtol=2e-2, atol=2e-2)

    print("KERNEL_OK")
</pallas_src>

<mosaic_0001>
module attributes {stable_mosaic.version = 11 : i64} {
  func.func @_attention_kernel(%arg0: i32, %arg1: memref<1x64x32xf32, #tpu.memory_space<vmem>>, %arg2: memref<32x96xbf16, #tpu.memory_space<vmem>>, %arg3: memref<1x96xf32, #tpu.memory_space<vmem>>, %arg4: memref<2x16x32xbf16, #tpu.memory_space<vmem>>, %arg5: memref<32x1xf32, #tpu.memory_space<vmem>>, %arg6: memref<1x32x64xf32, #tpu.memory_space<vmem>>) attributes {dimension_semantics = [#tpu.dimension_semantics<parallel>], iteration_bounds = array<i64: 2>, scalar_prefetch = 0 : i64, scratch_operands = 0 : i64, tpu.core_type = #tpu.core_type<tc>, window_params = [{transform_indices = @transform_0, window_bounds = array<i64: 1, 64, 32>}, {pipeline_mode = #tpu.pipeline_mode<synchronous>, transform_indices = @transform_1, window_bounds = array<i64: 32, 96>}, {pipeline_mode = #tpu.pipeline_mode<synchronous>, transform_indices = @transform_2, window_bounds = array<i64: 1, 96>}, {pipeline_mode = #tpu.pipeline_mode<synchronous>, transform_indices = @transform_3, window_bounds = array<i64: 2, 16, 32>}, {pipeline_mode = #tpu.pipeline_mode<synchronous>, transform_indices = @transform_4, window_bounds = array<i64: 32, 1>}, {transform_indices = @transform_5, window_bounds = array<i64: 1, 32, 64>}]} {
    %c0 = arith.constant 0 : index
    %c0_0 = arith.constant 0 : index
    %c0_1 = arith.constant 0 : index
    %0 = vector.load %arg1[%c0, %c0_0, %c0_1] : memref<1x64x32xf32, #tpu.memory_space<vmem>>, vector<1x64x32xf32>
    %1 = vector.shape_cast %0 : vector<1x64x32xf32> to vector<64x32xf32>
    %2 = arith.truncf %1 : vector<64x32xf32> to vector<64x32xbf16>
    %c0_2 = arith.constant 0 : index
    %c0_3 = arith.constant 0 : index
    %3 = vector.load %arg2[%c0_2, %c0_3] : memref<32x96xbf16, #tpu.memory_space<vmem>>, vector<32x96xbf16>
    %cst = arith.constant dense<0.000000e+00> : vector<64x96xf32>
    %4 = tpu.matmul %2, %3, %cst {dimension_numbers = #tpu.dot_dimension_numbers<[1], [0], [0], [1], [0, 0, 1, 1], [], []>} : vector<64x32xbf16>, vector<32x96xbf16>, vector<64x96xf32> -> vector<64x96xf32>
    %c0_4 = arith.constant 0 : index
    %c0_5 = arith.constant 0 : index
    %5 = vector.load %arg3[%c0_4, %c0_5] : memref<1x96xf32, #tpu.memory_space<vmem>>, vector<1x96xf32>
    %6 = vector.broadcast %5 : vector<1x96xf32> to vector<64x96xf32>
    %7 = arith.addf %4, %6 : vector<64x96xf32>
    %8 = tpu.transpose %1, [1, 0] : vector<64x32xf32> -> vector<32x64xf32>
    %c0_6 = arith.constant 0 : index
    %c0_7 = arith.constant 0 : index
    %9 = vector.load %arg5[%c0_6, %c0_7] : memref<32x1xf32, #tpu.memory_space<vmem>>, vector<32x1xf32>
    %10 = vector.broadcast %9 : vector<32x1xf32> to vector<32x64xf32>
    %11 = arith.addf %8, %10 : vector<32x64xf32>
    %12 = vector.extract_strided_slice %7 {offsets = [0, 0], sizes = [64, 16], strides = [1, 1]} : vector<64x96xf32> to vector<64x16xf32>
    %13 = vector.extract_strided_slice %7 {offsets = [0, 16], sizes = [64, 16], strides = [1, 1]} : vector<64x96xf32> to vector<64x16xf32>
    %14 = vector.extract_strided_slice %7 {offsets = [0, 32], sizes = [64, 16], strides = [1, 1]} : vector<64x96xf32> to vector<64x16xf32>
    %15 = arith.truncf %12 : vector<64x16xf32> to vector<64x16xbf16>
    %16 = arith.truncf %13 : vector<64x16xf32> to vector<64x16xbf16>
    %cst_8 = arith.constant dense<0.000000e+00> : vector<64x64xf32>
    %17 = tpu.matmul %15, %16, %cst_8 {dimension_numbers = #tpu.dot_dimension_numbers<[1], [1], [0], [0], [0, 0, 1, 0], [], []>} : vector<64x16xbf16>, vector<64x16xbf16>, vector<64x64xf32> -> vector<64x64xf32>
    %cst_9 = arith.constant dense<0xFF800000> : vector<64xf32>
    %18 = vector.multi_reduction <maximumf>, %17, %cst_9 [1] : vector<64x64xf32> to vector<64xf32>
    %19 = vector.shape_cast %18 : vector<64xf32> to vector<64x1xf32>
    %20 = vector.broadcast %19 : vector<64x1xf32> to vector<64x64xf32>
    %21 = arith.subf %17, %20 : vector<64x64xf32>
    %22 = math.exp %21 : vector<64x64xf32>
    %cst_10 = arith.constant dense<0.000000e+00> : vector<64xf32>
    %23 = vector.multi_reduction <add>, %22, %cst_10 [1] : vector<64x64xf32> to vector<64xf32>
    %24 = vector.shape_cast %23 : vector<64xf32> to vector<64x1xf32>
    %25 = tpu.reciprocal %24 {approx = true} : vector<64x1xf32> -> vector<64x1xf32>
    %26 = vector.broadcast %25 : vector<64x1xf32> to vector<64x64xf32>
    %27 = arith.mulf %22, %26 : vector<64x64xf32>
    %28 = arith.truncf %27 : vector<64x64xf32> to vector<64x64xbf16>
    %29 = arith.truncf %14 : vector<64x16xf32> to vector<64x16xbf16>
    %cst_11 = arith.constant dense<0.000000e+00> : vector<64x16xf32>
    %30 = tpu.matmul %28, %29, %cst_11 {dimension_numbers = #tpu.dot_dimension_numbers<[1], [0], [0], [1], [0, 0, 1, 1], [], []>} : vector<64x64xbf16>, vector<64x16xbf16>, vector<64x16xf32> -> vector<64x16xf32>
    %c0_12 = arith.constant 0 : index
    %c0_13 = arith.constant 0 : index
    %c0_14 = arith.constant 0 : index
    %31 = vector.load %arg4[%c0_12, %c0_13, %c0_14] : memref<2x16x32xbf16, #tpu.memory_space<vmem>>, vector<1x16x32xbf16>
    %32 = vector.shape_cast %31 : vector<1x16x32xbf16> to vector<16x32xbf16>
    %33 = arith.truncf %30 : vector<64x16xf32> to vector<64x16xbf16>
    %cst_15 = arith.constant dense<0.000000e+00> : vector<32x64xf32>
    %34 = tpu.matmul %32, %33, %cst_15 {dimension_numbers = #tpu.dot_dimension_numbers<[0], [1], [1], [0], [0, 1, 1, 0], [], []>} : vector<16x32xbf16>, vector<64x16xbf16>, vector<32x64xf32> -> vector<32x64xf32>
    %35 = arith.addf %11, %34 : vector<32x64xf32>
    %36 = vector.extract_strided_slice %7 {offsets = [0, 48], sizes = [64, 16], strides = [1, 1]} : vector<64x96xf32> to vector<64x16xf32>
    %37 = vector.extract_strided_slice %7 {offsets = [0, 64], sizes = [64, 16], strides = [1, 1]} : vector<64x96xf32> to vector<64x16xf32>
    %38 = vector.extract_strided_slice %7 {offsets = [0, 80], sizes = [64, 16], strides = [1, 1]} : vector<64x96xf32> to vector<64x16xf32>
    %39 = arith.truncf %36 : vector<64x16xf32> to vector<64x16xbf16>
    %40 = arith.truncf %37 : vector<64x16xf32> to vector<64x16xbf16>
    %cst_16 = arith.constant dense<0.000000e+00> : vector<64x64xf32>
    %41 = tpu.matmul %39, %40, %cst_16 {dimension_numbers = #tpu.dot_dimension_numbers<[1], [1], [0], [0], [0, 0, 1, 0], [], []>} : vector<64x16xbf16>, vector<64x16xbf16>, vector<64x64xf32> -> vector<64x64xf32>
    %cst_17 = arith.constant dense<0xFF800000> : vector<64xf32>
    %42 = vector.multi_reduction <maximumf>, %41, %cst_17 [1] : vector<64x64xf32> to vector<64xf32>
    %43 = vector.shape_cast %42 : vector<64xf32> to vector<64x1xf32>
    %44 = vector.broadcast %43 : vector<64x1xf32> to vector<64x64xf32>
    %45 = arith.subf %41, %44 : vector<64x64xf32>
    %46 = math.exp %45 : vector<64x64xf32>
    %cst_18 = arith.constant dense<0.000000e+00> : vector<64xf32>
    %47 = vector.multi_reduction <add>, %46, %cst_18 [1] : vector<64x64xf32> to vector<64xf32>
    %48 = vector.shape_cast %47 : vector<64xf32> to vector<64x1xf32>
    %49 = tpu.reciprocal %48 {approx = true} : vector<64x1xf32> -> vector<64x1xf32>
    %50 = vector.broadcast %49 : vector<64x1xf32> to vector<64x64xf32>
    %51 = arith.mulf %46, %50 : vector<64x64xf32>
    %52 = arith.truncf %51 : vector<64x64xf32> to vector<64x64xbf16>
    %53 = arith.truncf %38 : vector<64x16xf32> to vector<64x16xbf16>
    %cst_19 = arith.constant dense<0.000000e+00> : vector<64x16xf32>
    %54 = tpu.matmul %52, %53, %cst_19 {dimension_numbers = #tpu.dot_dimension_numbers<[1], [0], [0], [1], [0, 0, 1, 1], [], []>} : vector<64x64xbf16>, vector<64x16xbf16>, vector<64x16xf32> -> vector<64x16xf32>
    %c1 = arith.constant 1 : index
    %c0_20 = arith.constant 0 : index
    %c0_21 = arith.constant 0 : index
    %55 = vector.load %arg4[%c1, %c0_20, %c0_21] : memref<2x16x32xbf16, #tpu.memory_space<vmem>>, vector<1x16x32xbf16>
    %56 = vector.shape_cast %55 : vector<1x16x32xbf16> to vector<16x32xbf16>
    %57 = arith.truncf %54 : vector<64x16xf32> to vector<64x16xbf16>
    %cst_22 = arith.constant dense<0.000000e+00> : vector<32x64xf32>
    %58 = tpu.matmul %56, %57, %cst_22 {dimension_numbers = #tpu.dot_dimension_numbers<[0], [1], [1], [0], [0, 1, 1, 0], [], []>} : vector<16x32xbf16>, vector<64x16xbf16>, vector<32x64xf32> -> vector<32x64xf32>
    %59 = arith.addf %35, %58 : vector<32x64xf32>
    %c0_23 = arith.constant 0 : index
    %c0_24 = arith.constant 0 : index
    %c0_25 = arith.constant 0 : index
    %60 = vector.load %arg6[%c0_23, %c0_24, %c0_25] : memref<1x32x64xf32, #tpu.memory_space<vmem>>, vector<1x32x64xf32>
    %61 = vector.shape_cast %60 : vector<1x32x64xf32> to vector<32x64xf32>
    %62 = vector.shape_cast %59 : vector<32x64xf32> to vector<1x32x64xf32>
    tpu.vector_store %arg6[%c0_23, %c0_24, %c0_25], %62 {strides = array<i32>} : memref<1x32x64xf32, #tpu.memory_space<vmem>>, vector<1x32x64xf32>,
    return
  }
  func.func @transform_0(%arg0: i32) -> (i32, i32, i32) {
    %c0_i32 = arith.constant 0 : i32
    %c0_i32_0 = arith.constant 0 : i32
    %c0_i32_1 = arith.constant 0 : i32
    return %arg0, %c0_i32, %c0_i32_0 : i32, i32, i32
  }
  func.func @transform_1(%arg0: i32) -> (i32, i32) {
    %c0_i32 = arith.constant 0 : i32
    %c0_i32_0 = arith.constant 0 : i32
    %c0_i32_1 = arith.constant 0 : i32
    return %c0_i32, %c0_i32_0 : i32, i32
  }
  func.func @transform_2(%arg0: i32) -> (i32, i32) {
    %c0_i32 = arith.constant 0 : i32
    %c0_i32_0 = arith.constant 0 : i32
    %c0_i32_1 = arith.constant 0 : i32
    return %c0_i32, %c0_i32_0 : i32, i32
  }
  func.func @transform_3(%arg0: i32) -> (i32, i32, i32) {
    %c0_i32 = arith.constant 0 : i32
    %c0_i32_0 = arith.constant 0 : i32
    %c0_i32_1 = arith.constant 0 : i32
    %c0_i32_2 = arith.constant 0 : i32
    return %c0_i32, %c0_i32_0, %c0_i32_1 : i32, i32, i32
  }
  func.func @transform_4(%arg0: i32) -> (i32, i32) {
    %c0_i32 = arith.constant 0 : i32
    %c0_i32_0 = arith.constant 0 : i32
    %c0_i32_1 = arith.constant 0 : i32
    return %c0_i32, %c0_i32_0 : i32, i32
  }
  func.func @transform_5(%arg0: i32) -> (i32, i32, i32) {
    %c0_i32 = arith.constant 0 : i32
    %c0_i32_0 = arith.constant 0 : i32
    %c0_i32_1 = arith.constant 0 : i32
    return %arg0, %c0_i32, %c0_i32_0 : i32, i32, i32
  }
}

</mosaic_0001>

<llo_original>
// kernel: attention_block.1
$region0: #{attention_block.1}
  #allocation0 [shape = 'u32[]', space=smem, size = 0x4, offset = 0x4, fixed_abs, tag = 'smem constant byte address 0x4 - core index']
  #allocation1 [shape = 'u32[144,128]{1,0:T(1,128)}', space=vmem, size = 0x12000, scoped, tag = 'internal scratch']
  %s0 = inlined_call_operand.vmem [shape: f32[2,64,32], index: 0, kind: input, shape index: {}]
  %s1 = inlined_call_operand.vmem [shape: bf16[32,96], index: 1, kind: input, shape index: {}]
  %s2 = inlined_call_operand.vmem [shape: f32[1,96], index: 2, kind: input, shape index: {}]
  %s3 = inlined_call_operand.vmem [shape: bf16[2,16,32], index: 3, kind: input, shape index: {}]
  %s4 = inlined_call_operand.vmem [shape: f32[32,1], index: 4, kind: input, shape index: {}]
  %s5 = inlined_call_operand.vmem [shape: f32[2,32,64], index: 5, kind: output, shape index: {}]
  %s6 = sld [smem:[#allocation0]]
  $region53: #{attention_block.1} parent=0
    _
  %s8 = ssub.s32 1, %s6
  %s9 = scalar_select 0, %s8, %s6
  loop: start=0, step=1, limit=4
  $region2: #{attention_block.1} parent=0 // loop_pre_header
    _
  $region3: #{attention_block.1} parent=0 // loop_header
    %s11 = sphi 0, %s15
    %p12 = scmp.ge.s32.totalorder %s11, 4
    %s21 = sphi 0, %s23
    %s24 = sphi 0, %s21
    %s25 = sphi 0, %s24
    %s41 = sphi 0, %s25
    %s45 = sphi 0, %s45
    %s47 = sphi 0, %s45
    %s48 = sphi 0, %s47
    %s62 = sphi 0, %s48
    %s66 = sphi 0, %s66
    %s68 = sphi 0, %s66
    %s69 = sphi 0, %s68
    %s83 = sphi 0, %s69
    %s87 = sphi 0, %s87
    %s89 = sphi 0, %s87
    %s90 = sphi 0, %s89
    %s104 = sphi 0, %s90
    %s108 = sphi 0, %s108
    %s110 = sphi 0, %s108
    %s111 = sphi 0, %s110
    %s125 = sphi 0, %s111
    %s131 = sphi 0, %s133
    %s134 = sphi 0, %s131
    %s135 = sphi 0, %s134
    %s151 = sphi 0, %s135
  $region4: #{attention_block.1} parent=0 // loop_header_branch
    %14 = sbr.rel (%p12) target = $region8
  $region5: #{attention_block.1} parent=0 // loop_body
    %s16 = ssub.s32 %s11, 1
    %s17 = ssub.s32 %s11, 2
    %s18 = sadd.s32 %s11, 1
    %s19 = ssub.s32 %s11, %s18
    %p20 = scmp.eq.s32.totalorder %s19, 0
    %s22 = sadd.s32 %s21, 1
    %s23 = scalar_select %p20, %s21, %s22
    %p26 = pneg %p20
    %p27 = scmp.eq.s32.totalorder %s11, 1
    %p28 = por %p26, %p27
    %p29 = scmp.ne.s32.totalorder %s21, %s24
    %p30 = scmp.eq.s32.totalorder %s11, 0
    %p31 = por %p29, %p30
    %p32 = scmp.ne.s32.totalorder %s21, %s24
    %p33 = scmp.eq.s32.totalorder %s16, 1
    %p34 = por %p32, %p33
    %p35 = scmp.ne.s32.totalorder %s24, %s25
    %p36 = scmp.eq.s32.totalorder %s16, 0
    %p37 = por %p35, %p36
    %p38 = scmp.ne.s32.totalorder %s24, %s25
    %p39 = scmp.eq.s32.totalorder %s17, 1
    %p40 = por %p38, %p39
    %p42 = scmp.ne.s32.totalorder %s25, %s41
    %p43 = scmp.eq.s32.totalorder %s17, 0
    %p44 = por %p42, %p43
    %s46 = sadd.s32 %s45, 1
    %p49 = scmp.eq.s32.totalorder %s11, 1
    %p50 = scmp.ne.s32.totalorder %s45, %s47
    %p51 = scmp.eq.s32.totalorder %s11, 0
    %p52 = por %p50, %p51
    %p53 = scmp.ne.s32.totalorder %s45, %s47
    %p54 = scmp.eq.s32.totalorder %s16, 1
    %p55 = por %p53, %p54
    %p56 = scmp.ne.s32.totalorder %s47, %s48
    %p57 = scmp.eq.s32.totalorder %s16, 0
    %p58 = por %p56, %p57
    %p59 = scmp.ne.s32.totalorder %s47, %s48
    %p60 = scmp.eq.s32.totalorder %s17, 1
    %p61 = por %p59, %p60
    %p63 = scmp.ne.s32.totalorder %s48, %s62
    %p64 = scmp.eq.s32.totalorder %s17, 0
    %p65 = por %p63, %p64
    %s67 = sadd.s32 %s66, 1
    %p70 = scmp.eq.s32.totalorder %s11, 1
    %p71 = scmp.ne.s32.totalorder %s66, %s68
    %p72 = scmp.eq.s32.totalorder %s11, 0
    %p73 = por %p71, %p72
    %p74 = scmp.ne.s32.totalorder %s66, %s68
    %p75 = scmp.eq.s32.totalorder %s16, 1
    %p76 = por %p74, %p75
    %p77 = scmp.ne.s32.totalorder %s68, %s69
    %p78 = scmp.eq.s32.totalorder %s16, 0
    %p79 = por %p77, %p78
    %p80 = scmp.ne.s32.totalorder %s68, %s69
    %p81 = scmp.eq.s32.totalorder %s17, 1
    %p82 = por %p80, %p81
    %p84 = scmp.ne.s32.totalorder %s69, %s83
    %p85 = scmp.eq.s32.totalorder %s17, 0
    %p86 = por %p84, %p85
    %s88 = sadd.s32 %s87, 1
    %p91 = scmp.eq.s32.totalorder %s11, 1
    %p92 = scmp.ne.s32.totalorder %s87, %s89
    %p93 = scmp.eq.s32.totalorder %s11, 0
    %p94 = por %p92, %p93
    %p95 = scmp.ne.s32.totalorder %s87, %s89
    %p96 = scmp.eq.s32.totalorder %s16, 1
    %p97 = por %p95, %p96
    %p98 = scmp.ne.s32.totalorder %s89, %s90
    %p99 = scmp.eq.s32.totalorder %s16, 0
    %p100 = por %p98, %p99
    %p101 = scmp.ne.s32.totalorder %s89, %s90
    %p102 = scmp.eq.s32.totalorder %s17, 1
    %p103 = por %p101, %p102
    %p105 = scmp.ne.s32.totalorder %s90, %s104
    %p106 = scmp.eq.s32.totalorder %s17, 0
    %p107 = por %p105, %p106
    %s109 = sadd.s32 %s108, 1
    %p112 = scmp.eq.s32.totalorder %s11, 1
    %p113 = scmp.ne.s32.totalorder %s108, %s110
    %p114 = scmp.eq.s32.totalorder %s11, 0
    %p115 = por %p113, %p114
    %p116 = scmp.ne.s32.totalorder %s108, %s110
    %p117 = scmp.eq.s32.totalorder %s16, 1
    %p118 = por %p116, %p117
    %p119 = scmp.ne.s32.totalorder %s110, %s111
    %p120 = scmp.eq.s32.totalorder %s16, 0
    %p121 = por %p119, %p120
    %p122 = scmp.ne.s32.totalorder %s110, %s111
    %p123 = scmp.eq.s32.totalorder %s17, 1
    %p124 = por %p122, %p123
    %p126 = scmp.ne.s32.totalorder %s111, %s125
    %p127 = scmp.eq.s32.totalorder %s17, 0
    %p128 = por %p126, %p127
    %s129 = ssub.s32 %s11, %s18
    %p130 = scmp.eq.s32.totalorder %s129, 0
    %s132 = sadd.s32 %s131, 1
    %s133 = scalar_select %p130, %s131, %s132
    %p136 = pneg %p130
    %p137 = scmp.eq.s32.totalorder %s11, 1
    %p138 = por %p136, %p137
    %p139 = scmp.ne.s32.totalorder %s131, %s134
    %p140 = scmp.eq.s32.totalorder %s11, 0
    %p141 = por %p139, %p140
    %p142 = scmp.ne.s32.totalorder %s131, %s134
    %p143 = scmp.eq.s32.totalorder %s16, 1
    %p144 = por %p142, %p143
    %p145 = scmp.ne.s32.totalorder %s134, %s135
    %p146 = scmp.eq.s32.totalorder %s16, 0
    %p147 = por %p145, %p146
    %p148 = scmp.ne.s32.totalorder %s134, %s135
    %p149 = scmp.eq.s32.totalorder %s17, 1
    %p150 = por %p148, %p149
    %p152 = scmp.ne.s32.totalorder %s135, %s151
    %p153 = scmp.eq.s32.totalorder %s17, 0
    %p154 = por %p152, %p153
    %p155 = scmp.le.s32.totalorder 1, %s11
    %p156 = scmp.lt.s32.totalorder %s11, 3
    %p157 = pnand %p155, %p156
    %p158 = pneg %p157
    // Predicated region
    $region9: #{attention_block.1} parent=5 // pred_check
      _
    $region10: #{attention_block.1} parent=5 // pred_check_branch
      %160 = sbr.rel (%p157) target = $region12
    $region11: #{attention_block.1} parent=5 // pred_region
      %s161 = ssub.s32 %s11, 1
      // Predicated region
      $region13: #{attention_block.1} parent=11 // pred_check
        %p162 = pneg %p58
      $region14: #{attention_block.1} parent=11 // pred_check_branch
        %164 = sbr.rel (%p162) target = $region16
      $region15: #{attention_block.1} parent=11 // pred_region
        _
      $region16: #{attention_block.1} parent=11 // pred_fallthru
        _
      // Predicated region
      $region17: #{attention_block.1} parent=11 // pred_check
        %p165 = pneg %p79
      $region18: #{attention_block.1} parent=11 // pred_check_branch
        %167 = sbr.rel (%p165) target = $region20
      $region19: #{attention_block.1} parent=11 // pred_region
        _
      $region20: #{attention_block.1} parent=11 // pred_fallthru
        _
      // Predicated region
      $region21: #{attention_block.1} parent=11 // pred_check
        %p168 = pneg %p100
      $region22: #{attention_block.1} parent=11 // pred_check_branch
        %170 = sbr.rel (%p168) target = $region24
      $region23: #{attention_block.1} parent=11 // pred_region
        _
      $region24: #{attention_block.1} parent=11 // pred_fallthru
        _
      // Predicated region
      $region25: #{attention_block.1} parent=11 // pred_check
        %p171 = pneg %p121
      $region26: #{attention_block.1} parent=11 // pred_check_branch
        %173 = sbr.rel (%p171) target = $region28
      $region27: #{attention_block.1} parent=11 // pred_region
        _
      $region28: #{attention_block.1} parent=11 // pred_fallthru
        _
    $region12: #{attention_block.1} parent=5 // pred_fallthru
      _
    %p174 = scmp.lt.s32.totalorder %s11, 2
    // Predicated region
    $region29: #{attention_block.1} parent=5 // pred_check
      %p175 = pneg %p174
    $region30: #{attention_block.1} parent=5 // pred_check_branch
      %177 = sbr.rel (%p175) target = $region32
    $region31: #{attention_block.1} parent=5 // pred_region
      // Predicated region
      $region33: #{attention_block.1} parent=31 // pred_check
        %p178 = pneg %p31
      $region34: #{attention_block.1} parent=31 // pred_check_branch
        %180 = sbr.rel (%p178) target = $region36
      $region35: #{attention_block.1} parent=31 // pred_region
        %p181 = scmp.lt.s32.totalorder %s11, 1
        %s182 = scalar_select %p181, %s11, 1
        %s183 = smul.addr %s182, 8
        %s184 = smul.addr %s183, 8
        %s185 = scalar_lea.vmem %s0, %s184
      $region36: #{attention_block.1} parent=31 // pred_fallthru
        _
    $region32: #{attention_block.1} parent=5 // pred_fallthru
      _
    %p186 = scmp.le.s32.totalorder 1, %s11
    %p187 = scmp.lt.s32.totalorder %s11, 3
    %p188 = pnand %p186, %p187
    %p189 = pneg %p188
    // Predicated region
    $region37: #{attention_block.1} parent=5 // pred_check
      _
    $region38: #{attention_block.1} parent=5 // pred_check_branch
      %191 = sbr.rel (%p188) target = $region40
    $region39: #{attention_block.1} parent=5 // pred_region
      %s192 = ssub.s32 %s11, 1
      %p193 = scmp.lt.s32.totalorder %s16, 1
      %s194 = scalar_select %p193, %s16, 1
      %s195 = smul.addr %s194, 8
      %s196 = smul.addr %s195, 8
      %s197 = scalar_lea.vmem %s0, %s196
      %p198 = pneg %p37
      %p199 = pneg %p34
      %p200 = pneg %p58
      %p201 = pneg %p55
      %p202 = pneg %p79
      %p203 = pneg %p76
      %p204 = pneg %p100
      %p205 = pneg %p97
      %p206 = pneg %p121
      %p207 = pneg %p118
      %p208 = pneg %p147
      %p209 = pneg %p144
      %p210 = scmp.lt.s32.totalorder %s16, 1
      %s211 = scalar_select %p210, %s16, 1
      %s212 = smul.addr %s211, 4
      %s213 = smul.addr %s212, 8
      %s214 = scalar_lea.vmem %s5, %s213
      %p215 = scmp.lt.s32.totalorder %s16, 1
      %s216 = scalar_select %p215, %s16, 1
      %s217 = smul.addr %s216, 8
      %s218 = smul.addr %s217, 8
      %s219 = scalar_lea.vmem %s0, %s218
      %p220 = scmp.lt.s32.totalorder %s16, 1
      %s221 = scalar_select %p220, %s16, 1
      %s222 = smul.addr %s221, 4
      %s223 = smul.addr %s222, 8
      %s224 = scalar_lea.vmem %s5, %s223
      %v226 = vld [vmem:[%s219] sm:$0xff]
      %v227 = vld [vmem:[%s219 + $0x8] sm:$0xff]
      %v228 = vld [vmem:[%s219 + $0x10] sm:$0xff]
      %v229 = vld [vmem:[%s219 + $0x18] sm:$0xff]
      %v230 = vld [vmem:[%s219 + $0x20] sm:$0xff]
      %v231 = vld [vmem:[%s219 + $0x28] sm:$0xff]
      %v232 = vld [vmem:[%s219 + $0x30] sm:$0xff]
      %v233 = vld [vmem:[%s219 + $0x38] sm:$0xff]
      %v234 = vpack.c.bf16 %v227, %v226
      %v235 = vpack.c.bf16 %v229, %v228
      %v236 = vpack.c.bf16 %v231, %v230
      %v237 = vpack.c.bf16 %v233, %v232
      %v238 = vld [vmem:[%s1] sm:$0xf]
      %v239 = vld [vmem:[%s1 + $0x4] sm:$0xf]
      %v240 = vld [vmem:[%s1 + $0x8] sm:$0xf]
      %v241 = vld [vmem:[%s1 + $0xc] sm:$0xf]
      %v242 = vld [vmem:[%s2] sm:$0x1]
      %v244 = vlaneseq
      %v245 = vshrl.u32 %v244, 7
      %v246 = vsub.s32 0, %v245
      %v247 = vrot.slane %v242, %v246
      %v253 = vunpack.c.l.b16 %v238
      %v254 = vunpack.c.l.b16 %v239
      %v255 = vunpack.c.l.b16 %v240
      %v256 = vunpack.c.l.b16 %v241
      %v257 = vpack.c.b16 %v254, %v253
      %v258 = vpack.c.b16 %v256, %v255
      %vm261 = vcmask 261120
      %v263 = vsel %vm261, %v234, 0
      %v266 = vsel %vm261, %v235, 0
      %v269 = vsel %vm261, %v236, 0
      %v272 = vsel %vm261, %v237, 0
      %274 = vmatprep.subr.bf16.mxu0 0
      %275 = vmatpush1.bf16.msra.mxu0 %v257
      %276 = vmatprep.subr.bf16.mxu0 0
      %277 = vmatpush1.bf16.msra.mxu0 %v258
      %278 = vmatprep.subr.bf16.mxu0 0
      %279 = vmatpush1.bf16.msra.mxu0 0
      %280 = vmatprep.subr.bf16.mxu0 0
      %281 = vmatpush1.bf16.msra.mxu0 0
      %282 = vmatprep.subr.bf16.mxu0 0
      %283 = vmatpush1.bf16.msra.mxu0 0
      %284 = vmatprep.subr.bf16.mxu0 0
      %285 = vmatpush1.bf16.msra.mxu0 0
      %286 = vmatprep.subr.bf16.mxu0 0
      %287 = vmatpush1.bf16.msra.mxu0 0
      %288 = vmatprep.subr.bf16.mxu0 0
      %289 = vmatpush1.bf16.msra.mxu0 0
      %290 = vmatprep.subr.bf16.mxu0 0
      %291 = vmatpush1.bf16.msra.mxu0 0
      %292 = vmatprep.subr.bf16.mxu0 0
      %293 = vmatpush1.bf16.msra.mxu0 0
      %294 = vmatprep.subr.bf16.mxu0 0
      %295 = vmatpush1.bf16.msra.mxu0 0
      %296 = vmatprep.subr.bf16.mxu0 0
      %297 = vmatpush1.bf16.msra.mxu0 0
      %298 = vmatprep.subr.bf16.mxu0 0
      %299 = vmatpush1.bf16.msra.mxu0 0
      %300 = vmatprep.subr.bf16.mxu0 0
      %301 = vmatpush1.bf16.msra.mxu0 0
      %302 = vmatprep.subr.bf16.mxu0 0
      %303 = vmatpush1.bf16.msra.mxu0 0
      %304 = vmatprep.subr.bf16.mxu0 0
      %305 = vmatpush1.bf16.msra.mxu0 0
      %306 = vmatprep.mubr.bf16.mxu0 0
      %307 = vmatmul.mubr.bf16.gmra.mrb[0].mxu0 %v263
      %v308 = vpop.f32.mrb[0].mxu0
      %v309 = vadd.f32 %v247, %v308
      %v310 = vpop.f32.mrb[0].mxu0
      %v311 = vpop.f32.mrb[0].mxu0
      %v312 = vadd.f32 %v247, %v311
      %v313 = vpop.f32.mrb[0].mxu0
      %314 = vmatprep.mubr.bf16.mxu0 0
      %315 = vmatmul.mubr.bf16.gmra.mrb[0].mxu0 %v266
      %v316 = vpop.f32.mrb[0].mxu0
      %v317 = vadd.f32 %v247, %v316
      %v318 = vpop.f32.mrb[0].mxu0
      %v319 = vpop.f32.mrb[0].mxu0
      %v320 = vadd.f32 %v247, %v319
      %v321 = vpop.f32.mrb[0].mxu0
      %322 = vmatprep.mubr.bf16.mxu0 0
      %323 = vmatmul.mubr.bf16.gmra.mrb[0].mxu0 %v269
      %v324 = vpop.f32.mrb[0].mxu0
      %v325 = vadd.f32 %v247, %v324
      %v326 = vpop.f32.mrb[0].mxu0
      %v327 = vpop.f32.mrb[0].mxu0
      %v328 = vadd.f32 %v247, %v327
      %v329 = vpop.f32.mrb[0].mxu0
      %330 = vmatprep.mubr.bf16.mxu0 0
      %331 = vmatmul.mubr.bf16.gmra.mrb[0].mxu0 %v272
      %v332 = vpop.f32.mrb[0].mxu0
      %v333 = vadd.f32 %v247, %v332
      %v334 = vpop.f32.mrb[0].mxu0
      %v335 = vpop.f32.mrb[0].mxu0
      %v336 = vadd.f32 %v247, %v335
      %v337 = vpop.f32.mrb[0].mxu0
      %338 = vdwg.mxu0
      %339 = vxpose.xlu0.b32.start [1/16] %v226, 128
      %340 = vxpose.xlu0.b32.cont [2/16] %v227, 128
      %341 = vxpose.xlu0.b32.cont [3/16] %v228, 128
      %342 = vxpose.xlu0.b32.cont [4/16] %v229, 128
      %343 = vxpose.xlu0.b32.cont [5/16] %v230, 128
      %344 = vxpose.xlu0.b32.cont [6/16] %v231, 128
      %345 = vxpose.xlu0.b32.cont [7/16] %v232, 128
      %346 = vxpose.xlu0.b32.cont [8/16] %v233, 128
      %347 = vxpose.xlu0.b32.cont [9/16] 0.0, 128
      %348 = vxpose.xlu0.b32.cont [10/16] 0.0, 128
      %349 = vxpose.xlu0.b32.cont [11/16] 0.0, 128
      %350 = vxpose.xlu0.b32.cont [12/16] 0.0, 128
      %351 = vxpose.xlu0.b32.cont [13/16] 0.0, 128
      %352 = vxpose.xlu0.b32.cont [14/16] 0.0, 128
      %353 = vxpose.xlu0.b32.cont [15/16] 0.0, 128
      %354 = vxpose.xlu0.b32.end [16/16] 0.0, 128
      %v355 = vpop.trf.xlu0
      %v356 = vpop.trf.xlu0
      %v357 = vpop.trf.xlu0
      %v358 = vpop.trf.xlu0
      %v359 = vpop.trf.xlu0
      %v360 = vpop.trf.xlu0
      %v361 = vpop.trf.xlu0
      %v362 = vpop.trf.xlu0
      %v363 = vpop.trf.xlu0
      %v364 = vpop.trf.xlu0
      %v365 = vpop.trf.xlu0
      %v366 = vpop.trf.xlu0
      %v367 = vpop.trf.xlu0
      %v368 = vpop.trf.xlu0
      %v369 = vpop.trf.xlu0
      %v370 = vpop.trf.xlu0
      %v371 = vld [vmem:[%s4] sm:$0xff]
      %v372 = vld [vmem:[%s4 + $0x8] sm:$0xff]
      %v373 = vld [vmem:[%s4 + $0x10] sm:$0xff]
      %v374 = vld [vmem:[%s4 + $0x18] sm:$0xff]
      %376 = vset.pattern.permute.xlu0 0
      %377 = vperm.xlu0 %376, %v371
      %v378 = vpop.permute.xlu0 %377
      %381 = vset.pattern.permute.xlu0 0
      %382 = vperm.xlu0 %381, %v372
      %v383 = vpop.permute.xlu0 %382
      %386 = vset.pattern.permute.xlu0 0
      %387 = vperm.xlu0 %386, %v373
      %v388 = vpop.permute.xlu0 %387
      %391 = vset.pattern.permute.xlu0 0
      %392 = vperm.xlu0 %391, %v374
      %v393 = vpop.permute.xlu0 %392
      %v395 = vadd.f32 %v355, %v378
      %v396 = vadd.f32 %v356, %v383
      %v397 = vadd.f32 %v357, %v388
      %v398 = vadd.f32 %v358, %v393
      %v399 = vpack.c.bf16 %v312, %v309
      %v400 = vpack.c.bf16 %v320, %v317
      %v401 = vpack.c.bf16 %v328, %v325
      %v402 = vpack.c.bf16 %v336, %v333
      %407 = vrot.lane.b32.xlu0 %v399, 112
      %v408 = vpop.permute.xlu0 %407
      %409 = vrot.lane.b32.xlu0 %v400, 112
      %v410 = vpop.permute.xlu0 %409
      %411 = vrot.lane.b32.xlu0 %v401, 112
      %v412 = vpop.permute.xlu0 %411
      %413 = vrot.lane.b32.xlu0 %v402, 112
      %v414 = vpop.permute.xlu0 %413
      %vm415 = vcmask 130048
      %v417 = vsel %vm415, %v399, 0
      %v420 = vsel %vm415, %v400, 0
      %v423 = vsel %vm415, %v401, 0
      %v426 = vsel %vm415, %v402, 0
      %v429 = vsel %vm415, %v408, 0
      %v432 = vsel %vm415, %v410, 0
      %v435 = vsel %vm415, %v412, 0
      %v438 = vsel %vm415, %v414, 0
      %440 = vmatprep.subr.bf16.mxu0 0
      %441 = vmatpush1.bf16.xpose.msra.mxu0 %v429
      %442 = vmatprep.subr.bf16.mxu0 0
      %443 = vmatpush1.bf16.xpose.msra.mxu0 %v432
      %444 = vmatprep.subr.bf16.mxu0 0
      %445 = vmatpush1.bf16.xpose.msra.mxu0 %v435
      %446 = vmatprep.subr.bf16.mxu0 0
      %447 = vmatpush1.bf16.xpose.msra.mxu0 %v438
      %448 = vmatprep.subr.bf16.mxu0 0
      %449 = vmatpush1.bf16.xpose.msra.mxu0 0
      %450 = vmatprep.subr.bf16.mxu0 0
      %451 = vmatpush1.bf16.xpose.msra.mxu0 0
      %452 = vmatprep.subr.bf16.mxu0 0
      %453 = vmatpush1.bf16.xpose.msra.mxu0 0
      %454 = vmatprep.subr.bf16.mxu0 0
      %455 = vmatpush1.bf16.xpose.msra.mxu0 0
      %456 = vmatprep.subr.bf16.mxu0 0
      %457 = vmatpush1.bf16.xpose.msra.mxu0 0
      %458 = vmatprep.subr.bf16.mxu0 0
      %459 = vmatpush1.bf16.xpose.msra.mxu0 0
      %460 = vmatprep.subr.bf16.mxu0 0
      %461 = vmatpush1.bf16.xpose.msra.mxu0 0
      %462 = vmatprep.subr.bf16.mxu0 0
      %463 = vmatpush1.bf16.xpose.msra.mxu0 0
      %464 = vmatprep.subr.bf16.mxu0 0
      %465 = vmatpush1.bf16.xpose.msra.mxu0 0
      %466 = vmatprep.subr.bf16.mxu0 0
      %467 = vmatpush1.bf16.xpose.msra.mxu0 0
      %468 = vmatprep.subr.bf16.mxu0 0
      %469 = vmatpush1.bf16.xpose.msra.mxu0 0
      %470 = vmatprep.subr.bf16.mxu0 0
      %471 = vmatpush1.bf16.xpose.msra.mxu0 0
      %472 = vmatprep.mubr.bf16.mxu0 0
      %473 = vmatmul.mubr.bf16.gmra.mrb[0].mxu0 %v417
      %v474 = vpop.f32.mrb[0].mxu0
      %v475 = vadd.f32 0.0, %v474
      %v476 = vpop.f32.mrb[0].mxu0
      %v477 = vpop.f32.mrb[0].mxu0
      %v478 = vadd.f32 0.0, %v477
      %v479 = vpop.f32.mrb[0].mxu0
      %480 = vmatprep.mubr.bf16.mxu0 0
      %481 = vmatmul.mubr.bf16.gmra.mrb[0].mxu0 %v420
      %v482 = vpop.f32.mrb[0].mxu0
      %v483 = vadd.f32 0.0, %v482
      %v484 = vpop.f32.mrb[0].mxu0
      %v485 = vpop.f32.mrb[0].mxu0
      %v486 = vadd.f32 0.0, %v485
      %v487 = vpop.f32.mrb[0].mxu0
      %488 = vmatprep.mubr.bf16.mxu0 0
      %489 = vmatmul.mubr.bf16.gmra.mrb[0].mxu0 %v423
      %v490 = vpop.f32.mrb[0].mxu0
      %v491 = vadd.f32 0.0, %v490
      %v492 = vpop.f32.mrb[0].mxu0
      %v493 = vpop.f32.mrb[0].mxu0
      %v494 = vadd.f32 0.0, %v493
      %v495 = vpop.f32.mrb[0].mxu0
      %496 = vmatprep.mubr.bf16.mxu0 0
      %497 = vmatmul.mubr.bf16.gmra.mrb[0].mxu0 %v426
      %v498 = vpop.f32.mrb[0].mxu0
      %v499 = vadd.f32 0.0, %v498
      %v500 = vpop.f32.mrb[0].mxu0
      %v501 = vpop.f32.mrb[0].mxu0
      %v502 = vadd.f32 0.0, %v501
      %v503 = vpop.f32.mrb[0].mxu0
      %504 = vdwg.mxu0
      %vm505 = vcmask 523264
      %v506 = vsel %vm505, %v475, -inf
      %507 = vmax.xlane.f32.xlu0 %v506
      %v508 = vpop.xlane.xlu0 %507
      %v509 = vsel %vm505, %v478, -inf
      %510 = vmax.xlane.f32.xlu0 %v509
      %v511 = vpop.xlane.xlu0 %510
      %v512 = vsel %vm505, %v483, -inf
      %513 = vmax.xlane.f32.xlu0 %v512
      %v514 = vpop.xlane.xlu0 %513
      %v515 = vsel %vm505, %v486, -inf
      %516 = vmax.xlane.f32.xlu0 %v515
      %v517 = vpop.xlane.xlu0 %516
      %v518 = vsel %vm505, %v491, -inf
      %519 = vmax.xlane.f32.xlu0 %v518
      %v520 = vpop.xlane.xlu0 %519
      %v521 = vsel %vm505, %v494, -inf
      %522 = vmax.xlane.f32.xlu0 %v521
      %v523 = vpop.xlane.xlu0 %522
      %v524 = vsel %vm505, %v499, -inf
      %525 = vmax.xlane.f32.xlu0 %v524
      %v526 = vpop.xlane.xlu0 %525
      %v527 = vsel %vm505, %v502, -inf
      %528 = vmax.xlane.f32.xlu0 %v527
      %v529 = vpop.xlane.xlu0 %528
      %v530 = vsub.f32 %v475, %v508
      %v531 = vsub.f32 %v478, %v511
      %v532 = vsub.f32 %v483, %v514
      %v533 = vsub.f32 %v486, %v517
      %v534 = vsub.f32 %v491, %v520
      %v535 = vsub.f32 %v494, %v523
      %v536 = vsub.f32 %v499, %v526
      %v537 = vsub.f32 %v502, %v529
      %v538 = vmul.f32 %v530, 1.442695
      %v539 = vpow.pop %v538
      %v540 = vmul.f32 %v531, 1.442695
      %v541 = vpow.pop %v540
      %v542 = vmul.f32 %v532, 1.442695
      %v543 = vpow.pop %v542
      %v544 = vmul.f32 %v533, 1.442695
      %v545 = vpow.pop %v544
      %v546 = vmul.f32 %v534, 1.442695
      %v547 = vpow.pop %v546
      %v548 = vmul.f32 %v535, 1.442695
      %v549 = vpow.pop %v548
      %v550 = vmul.f32 %v536, 1.442695
      %v551 = vpow.pop %v550
      %v552 = vmul.f32 %v537, 1.442695
      %v553 = vpow.pop %v552
      %v554 = vsel %vm505, %v539, 0.0
      %555 = vadd.xlane.f32.xlu0 %v554
      %v556 = vpop.xlane.xlu0 %555
      %v557 = vsel %vm505, %v541, 0.0
      %558 = vadd.xlane.f32.xlu0 %v557
      %v559 = vpop.xlane.xlu0 %558
      %v560 = vsel %vm505, %v543, 0.0
      %561 = vadd.xlane.f32.xlu0 %v560
      %v562 = vpop.xlane.xlu0 %561
      %v563 = vsel %vm505, %v545, 0.0
      %564 = vadd.xlane.f32.xlu0 %v563
      %v565 = vpop.xlane.xlu0 %564
      %v566 = vsel %vm505, %v547, 0.0
      %567 = vadd.xlane.f32.xlu0 %v566
      %v568 = vpop.xlane.xlu0 %567
      %v569 = vsel %vm505, %v549, 0.0
      %570 = vadd.xlane.f32.xlu0 %v569
      %v571 = vpop.xlane.xlu0 %570
      %v572 = vsel %vm505, %v551, 0.0
      %573 = vadd.xlane.f32.xlu0 %v572
      %v574 = vpop.xlane.xlu0 %573
      %v575 = vsel %vm505, %v553, 0.0
      %576 = vadd.xlane.f32.xlu0 %v575
      %v577 = vpop.xlane.xlu0 %576
      %v578 = vrcp.pop %v556
      %v579 = vrcp.pop %v559
      %v580 = vrcp.pop %v562
      %v581 = vrcp.pop %v565
      %v582 = vrcp.pop %v568
      %v583 = vrcp.pop %v571
      %v584 = vrcp.pop %v574
      %v585 = vrcp.pop %v577
      %v586 = vmul.f32 %v539, %v578
      %v587 = vmul.f32 %v541, %v579
      %v588 = vmul.f32 %v543, %v580
      %v589 = vmul.f32 %v545, %v581
      %v590 = vmul.f32 %v547, %v582
      %v591 = vmul.f32 %v549, %v583
      %v592 = vmul.f32 %v551, %v584
      %v593 = vmul.f32 %v553, %v585
      %v594 = vpack.c.bf16 %v587, %v586
      %v595 = vpack.c.bf16 %v589, %v588
      %v596 = vpack.c.bf16 %v591, %v590
      %v597 = vpack.c.bf16 %v593, %v592
      %598 = vrot.lane.b32.xlu0 %v399, 96
      %v599 = vpop.permute.xlu0 %598
      %600 = vrot.lane.b32.xlu0 %v400, 96
      %v601 = vpop.permute.xlu0 %600
      %602 = vrot.lane.b32.xlu0 %v401, 96
      %v603 = vpop.permute.xlu0 %602
      %604 = vrot.lane.b32.xlu0 %v402, 96
      %v605 = vpop.permute.xlu0 %604
      %v611 = vsel %vm505, %v594, 0
      %v614 = vsel %vm505, %v595, 0
      %v617 = vsel %vm505, %v596, 0
      %v620 = vsel %vm505, %v597, 0
      %622 = vmatprep.subr.bf16.mxu0 0
      %623 = vmatpush1.bf16.msra.mxu0 %v599
      %624 = vmatprep.subr.bf16.mxu0 0
      %625 = vmatpush1.bf16.msra.mxu0 %v601
      %626 = vmatprep.subr.bf16.mxu0 0
      %627 = vmatpush1.bf16.msra.mxu0 %v603
      %628 = vmatprep.subr.bf16.mxu0 0
      %629 = vmatpush1.bf16.msra.mxu0 %v605
      %630 = vmatprep.subr.bf16.mxu0 0
      %631 = vmatpush1.bf16.msra.mxu0 0
      %632 = vmatprep.subr.bf16.mxu0 0
      %633 = vmatpush1.bf16.msra.mxu0 0
      %634 = vmatprep.subr.bf16.mxu0 0
      %635 = vmatpush1.bf16.msra.mxu0 0
      %636 = vmatprep.subr.bf16.mxu0 0
      %637 = vmatpush1.bf16.msra.mxu0 0
      %638 = vmatprep.subr.bf16.mxu0 0
      %639 = vmatpush1.bf16.msra.mxu0 0
      %640 = vmatprep.subr.bf16.mxu0 0
      %641 = vmatpush1.bf16.msra.mxu0 0
      %642 = vmatprep.subr.bf16.mxu0 0
      %643 = vmatpush1.bf16.msra.mxu0 0
      %644 = vmatprep.subr.bf16.mxu0 0
      %645 = vmatpush1.bf16.msra.mxu0 0
      %646 = vmatprep.subr.bf16.mxu0 0
      %647 = vmatpush1.bf16.msra.mxu0 0
      %648 = vmatprep.subr.bf16.mxu0 0
      %649 = vmatpush1.bf16.msra.mxu0 0
      %650 = vmatprep.subr.bf16.mxu0 0
      %651 = vmatpush1.bf16.msra.mxu0 0
      %652 = vmatprep.subr.bf16.mxu0 0
      %653 = vmatpush1.bf16.msra.mxu0 0
      %654 = vmatprep.mubr.bf16.mxu0 0
      %655 = vmatmul.mubr.bf16.gmra.mrb[0].mxu0 %v611
      %v656 = vpop.f32.mrb[0].mxu0
      %v657 = vadd.f32 0.0, %v656
      %v658 = vpop.f32.mrb[0].mxu0
      %v659 = vpop.f32.mrb[0].mxu0
      %v660 = vadd.f32 0.0, %v659
      %v661 = vpop.f32.mrb[0].mxu0
      %662 = vmatprep.mubr.bf16.mxu0 0
      %663 = vmatmul.mubr.bf16.gmra.mrb[0].mxu0 %v614
      %v664 = vpop.f32.mrb[0].mxu0
      %v665 = vadd.f32 0.0, %v664
      %v666 = vpop.f32.mrb[0].mxu0
      %v667 = vpop.f32.mrb[0].mxu0
      %v668 = vadd.f32 0.0, %v667
      %v669 = vpop.f32.mrb[0].mxu0
      %670 = vmatprep.mubr.bf16.mxu0 0
      %671 = vmatmul.mubr.bf16.gmra.mrb[0].mxu0 %v617
      %v672 = vpop.f32.mrb[0].mxu0
      %v673 = vadd.f32 0.0, %v672
      %v674 = vpop.f32.mrb[0].mxu0
      %v675 = vpop.f32.mrb[0].mxu0
      %v676 = vadd.f32 0.0, %v675
      %v677 = vpop.f32.mrb[0].mxu0
      %678 = vmatprep.mubr.bf16.mxu0 0
      %679 = vmatmul.mubr.bf16.gmra.mrb[0].mxu0 %v620
      %v680 = vpop.f32.mrb[0].mxu0
      %v681 = vadd.f32 0.0, %v680
      %v682 = vpop.f32.mrb[0].mxu0
      %v683 = vpop.f32.mrb[0].mxu0
      %v684 = vadd.f32 0.0, %v683
      %v685 = vpop.f32.mrb[0].mxu0
      %686 = vdwg.mxu0
      %v687 = vld [vmem:[%s3] sm:$0xf]
      %v688 = vld [vmem:[%s3 + $0x4] sm:$0xf]
      %v689 = vpack.c.bf16 %v660, %v657
      %v690 = vpack.c.bf16 %v668, %v665
      %v691 = vpack.c.bf16 %v676, %v673
      %v692 = vpack.c.bf16 %v684, %v681
      %v695 = vunpack.c.l.b16 %v687
      %v696 = vunpack.c.l.b16 %v688
      %v697 = vpack.c.b16 %v696, %v695
      %699 = vxpose.xlu0.c.b16.start [1/8] %v697, 128
      %700 = vxpose.xlu0.c.b16.cont [2/8] 0, 128
      %701 = vxpose.xlu0.c.b16.cont [3/8] 0, 128
      %702 = vxpose.xlu0.c.b16.cont [4/8] 0, 128
      %703 = vxpose.xlu0.c.b16.cont [5/8] 0, 128
      %704 = vxpose.xlu0.c.b16.cont [6/8] 0, 128
      %705 = vxpose.xlu0.c.b16.cont [7/8] 0, 128
      %706 = vxpose.xlu0.c.b16.end [8/8] 0, 128
      %v707 = vpop.trf.xlu0
      %v708 = vpop.trf.xlu0
      %v709 = vpop.trf.xlu0
      %v710 = vpop.trf.xlu0
      %v711 = vpop.trf.xlu0
      %v712 = vpop.trf.xlu0
      %v713 = vpop.trf.xlu0
      %v714 = vpop.trf.xlu0
      %v716 = vsel %vm415, %v707, 0
      %v719 = vsel %vm415, %v708, 0
      %v722 = vsel %vm415, %v689, 0
      %v725 = vsel %vm415, %v690, 0
      %v728 = vsel %vm415, %v691, 0
      %v731 = vsel %vm415, %v692, 0
      %733 = vmatprep.subr.bf16.mxu0 0
      %734 = vmatpush1.bf16.xpose.msra.mxu0 %v722
      %735 = vmatprep.subr.bf16.mxu0 0
      %736 = vmatpush1.bf16.xpose.msra.mxu0 %v725
      %737 = vmatprep.subr.bf16.mxu0 0
      %738 = vmatpush1.bf16.xpose.msra.mxu0 %v728
      %739 = vmatprep.subr.bf16.mxu0 0
      %740 = vmatpush1.bf16.xpose.msra.mxu0 %v731
      %741 = vmatprep.subr.bf16.mxu0 0
      %742 = vmatpush1.bf16.xpose.msra.mxu0 0
      %743 = vmatprep.subr.bf16.mxu0 0
      %744 = vmatpush1.bf16.xpose.msra.mxu0 0
      %745 = vmatprep.subr.bf16.mxu0 0
      %746 = vmatpush1.bf16.xpose.msra.mxu0 0
      %747 = vmatprep.subr.bf16.mxu0 0
      %748 = vmatpush1.bf16.xpose.msra.mxu0 0
      %749 = vmatprep.subr.bf16.mxu0 0
      %750 = vmatpush1.bf16.xpose.msra.mxu0 0
      %751 = vmatprep.subr.bf16.mxu0 0
      %752 = vmatpush1.bf16.xpose.msra.mxu0 0
      %753 = vmatprep.subr.bf16.mxu0 0
      %754 = vmatpush1.bf16.xpose.msra.mxu0 0
      %755 = vmatprep.subr.bf16.mxu0 0
      %756 = vmatpush1.bf16.xpose.msra.mxu0 0
      %757 = vmatprep.subr.bf16.mxu0 0
      %758 = vmatpush1.bf16.xpose.msra.mxu0 0
      %759 = vmatprep.subr.bf16.mxu0 0
      %760 = vmatpush1.bf16.xpose.msra.mxu0 0
      %761 = vmatprep.subr.bf16.mxu0 0
      %762 = vmatpush1.bf16.xpose.msra.mxu0 0
      %763 = vmatprep.subr.bf16.mxu0 0
      %764 = vmatpush1.bf16.xpose.msra.mxu0 0
      %765 = vmatprep.mubr.bf16.mxu0 0
      %766 = vmatmul.mubr.bf16.gmra.mrb[0].mxu0 %v716
      %v767 = vpop.f32.mrb[0].mxu0
      %v768 = vadd.f32 0.0, %v767
      %v769 = vpop.f32.mrb[0].mxu0
      %v770 = vpop.f32.mrb[0].mxu0
      %v771 = vadd.f32 0.0, %v770
      %v772 = vpop.f32.mrb[0].mxu0
      %773 = vmatprep.mubr.bf16.mxu0 0
      %774 = vmatmul.mubr.bf16.gmra.mrb[0].mxu0 %v719
      %v775 = vpop.f32.mrb[0].mxu0
      %v776 = vadd.f32 0.0, %v775
      %v777 = vpop.f32.mrb[0].mxu0
      %v778 = vpop.f32.mrb[0].mxu0
      %v779 = vadd.f32 0.0, %v778
      %v780 = vpop.f32.mrb[0].mxu0
      %781 = vdwg.mxu0
      %v782 = vadd.f32 %v395, %v768
      %v783 = vadd.f32 %v396, %v771
      %v784 = vadd.f32 %v397, %v776
      %v785 = vadd.f32 %v398, %v779
      %786 = vrot.lane.b32.xlu0 %v399, 80
      %v787 = vpop.permute.xlu0 %786
      %788 = vrot.lane.b32.xlu0 %v400, 80
      %v789 = vpop.permute.xlu0 %788
      %790 = vrot.lane.b32.xlu0 %v401, 80
      %v791 = vpop.permute.xlu0 %790
      %792 = vrot.lane.b32.xlu0 %v402, 80
      %v793 = vpop.permute.xlu0 %792
      %794 = vrot.lane.b32.xlu0 %v399, 64
      %v795 = vpop.permute.xlu0 %794
      %796 = vrot.lane.b32.xlu0 %v400, 64
      %v797 = vpop.permute.xlu0 %796
      %798 = vrot.lane.b32.xlu0 %v401, 64
      %v799 = vpop.permute.xlu0 %798
      %800 = vrot.lane.b32.xlu0 %v402, 64
      %v801 = vpop.permute.xlu0 %800
      %v803 = vsel %vm415, %v787, 0
      %v806 = vsel %vm415, %v789, 0
      %v809 = vsel %vm415, %v791, 0
      %v812 = vsel %vm415, %v793, 0
      %v815 = vsel %vm415, %v795, 0
      %v818 = vsel %vm415, %v797, 0
      %v821 = vsel %vm415, %v799, 0
      %v824 = vsel %vm415, %v801, 0
      %826 = vmatprep.subr.bf16.mxu0 0
      %827 = vmatpush1.bf16.xpose.msra.mxu0 %v815
      %828 = vmatprep.subr.bf16.mxu0 0
      %829 = vmatpush1.bf16.xpose.msra.mxu0 %v818
      %830 = vmatprep.subr.bf16.mxu0 0
      %831 = vmatpush1.bf16.xpose.msra.mxu0 %v821
      %832 = vmatprep.subr.bf16.mxu0 0
      %833 = vmatpush1.bf16.xpose.msra.mxu0 %v824
      %834 = vmatprep.subr.bf16.mxu0 0
      %835 = vmatpush1.bf16.xpose.msra.mxu0 0
      %836 = vmatprep.subr.bf16.mxu0 0
      %837 = vmatpush1.bf16.xpose.msra.mxu0 0
      %838 = vmatprep.subr.bf16.mxu0 0
      %839 = vmatpush1.bf16.xpose.msra.mxu0 0
      %840 = vmatprep.subr.bf16.mxu0 0
      %841 = vmatpush1.bf16.xpose.msra.mxu0 0
      %842 = vmatprep.subr.bf16.mxu0 0
      %843 = vmatpush1.bf16.xpose.msra.mxu0 0
      %844 = vmatprep.subr.bf16.mxu0 0
      %845 = vmatpush1.bf16.xpose.msra.mxu0 0
      %846 = vmatprep.subr.bf16.mxu0 0
      %847 = vmatpush1.bf16.xpose.msra.mxu0 0
      %848 = vmatprep.subr.bf16.mxu0 0
      %849 = vmatpush1.bf16.xpose.msra.mxu0 0
      %850 = vmatprep.subr.bf16.mxu0 0
      %851 = vmatpush1.bf16.xpose.msra.mxu0 0
      %852 = vmatprep.subr.bf16.mxu0 0
      %853 = vmatpush1.bf16.xpose.msra.mxu0 0
      %854 = vmatprep.subr.bf16.mxu0 0
      %855 = vmatpush1.bf16.xpose.msra.mxu0 0
      %856 = vmatprep.subr.bf16.mxu0 0
      %857 = vmatpush1.bf16.xpose.msra.mxu0 0
      %858 = vmatprep.mubr.bf16.mxu0 0
      %859 = vmatmul.mubr.bf16.gmra.mrb[0].mxu0 %v803
      %v860 = vpop.f32.mrb[0].mxu0
      %v861 = vadd.f32 0.0, %v860
      %v862 = vpop.f32.mrb[0].mxu0
      %v863 = vpop.f32.mrb[0].mxu0
      %v864 = vadd.f32 0.0, %v863
      %v865 = vpop.f32.mrb[0].mxu0
      %866 = vmatprep.mubr.bf16.mxu0 0
      %867 = vmatmul.mubr.bf16.gmra.mrb[0].mxu0 %v806
      %v868 = vpop.f32.mrb[0].mxu0
      %v869 = vadd.f32 0.0, %v868
      %v870 = vpop.f32.mrb[0].mxu0
      %v871 = vpop.f32.mrb[0].mxu0
      %v872 = vadd.f32 0.0, %v871
      %v873 = vpop.f32.mrb[0].mxu0
      %874 = vmatprep.mubr.bf16.mxu0 0
      %875 = vmatmul.mubr.bf16.gmra.mrb[0].mxu0 %v809
      %v876 = vpop.f32.mrb[0].mxu0
      %v877 = vadd.f32 0.0, %v876
      %v878 = vpop.f32.mrb[0].mxu0
      %v879 = vpop.f32.mrb[0].mxu0
      %v880 = vadd.f32 0.0, %v879
      %v881 = vpop.f32.mrb[0].mxu0
      %882 = vmatprep.mubr.bf16.mxu0 0
      %883 = vmatmul.mubr.bf16.gmra.mrb[0].mxu0 %v812
      %v884 = vpop.f32.mrb[0].mxu0
      %v885 = vadd.f32 0.0, %v884
      %v886 = vpop.f32.mrb[0].mxu0
      %v887 = vpop.f32.mrb[0].mxu0
      %v888 = vadd.f32 0.0, %v887
      %v889 = vpop.f32.mrb[0].mxu0
      %890 = vdwg.mxu0
      %v891 = vsel %vm505, %v861, -inf
      %892 = vmax.xlane.f32.xlu0 %v891
      %v893 = vpop.xlane.xlu0 %892
      %v894 = vsel %vm505, %v864, -inf
      %895 = vmax.xlane.f32.xlu0 %v894
      %v896 = vpop.xlane.xlu0 %895
      %v897 = vsel %vm505, %v869, -inf
      %898 = vmax.xlane.f32.xlu0 %v897
      %v899 = vpop.xlane.xlu0 %898
      %v900 = vsel %vm505, %v872, -inf
      %901 = vmax.xlane.f32.xlu0 %v900
      %v902 = vpop.xlane.xlu0 %901
      %v903 = vsel %vm505, %v877, -inf
      %904 = vmax.xlane.f32.xlu0 %v903
      %v905 = vpop.xlane.xlu0 %904
      %v906 = vsel %vm505, %v880, -inf
      %907 = vmax.xlane.f32.xlu0 %v906
      %v908 = vpop.xlane.xlu0 %907
      %v909 = vsel %vm505, %v885, -inf
      %910 = vmax.xlane.f32.xlu0 %v909
      %v911 = vpop.xlane.xlu0 %910
      %v912 = vsel %vm505, %v888, -inf
      %913 = vmax.xlane.f32.xlu0 %v912
      %v914 = vpop.xlane.xlu0 %913
      %v915 = vsub.f32 %v861, %v893
      %v916 = vsub.f32 %v864, %v896
      %v917 = vsub.f32 %v869, %v899
      %v918 = vsub.f32 %v872, %v902
      %v919 = vsub.f32 %v877, %v905
      %v920 = vsub.f32 %v880, %v908
      %v921 = vsub.f32 %v885, %v911
      %v922 = vsub.f32 %v888, %v914
      %v923 = vmul.f32 %v915, 1.442695
      %v924 = vpow.pop %v923
      %v925 = vmul.f32 %v916, 1.442695
      %v926 = vpow.pop %v925
      %v927 = vmul.f32 %v917, 1.442695
      %v928 = vpow.pop %v927
      %v929 = vmul.f32 %v918, 1.442695
      %v930 = vpow.pop %v929
      %v931 = vmul.f32 %v919, 1.442695
      %v932 = vpow.pop %v931
      %v933 = vmul.f32 %v920, 1.442695
      %v934 = vpow.pop %v933
      %v935 = vmul.f32 %v921, 1.442695
      %v936 = vpow.pop %v935
      %v937 = vmul.f32 %v922, 1.442695
      %v938 = vpow.pop %v937
      %v939 = vsel %vm505, %v924, 0.0
      %940 = vadd.xlane.f32.xlu0 %v939
      %v941 = vpop.xlane.xlu0 %940
      %v942 = vsel %vm505, %v926, 0.0
      %943 = vadd.xlane.f32.xlu0 %v942
      %v944 = vpop.xlane.xlu0 %943
      %v945 = vsel %vm505, %v928, 0.0
      %946 = vadd.xlane.f32.xlu0 %v945
      %v947 = vpop.xlane.xlu0 %946
      %v948 = vsel %vm505, %v930, 0.0
      %949 = vadd.xlane.f32.xlu0 %v948
      %v950 = vpop.xlane.xlu0 %949
      %v951 = vsel %vm505, %v932, 0.0
      %952 = vadd.xlane.f32.xlu0 %v951
      %v953 = vpop.xlane.xlu0 %952
      %v954 = vsel %vm505, %v934, 0.0
      %955 = vadd.xlane.f32.xlu0 %v954
      %v956 = vpop.xlane.xlu0 %955
      %v957 = vsel %vm505, %v936, 0.0
      %958 = vadd.xlane.f32.xlu0 %v957
      %v959 = vpop.xlane.xlu0 %958
      %v960 = vsel %vm505, %v938, 0.0
      %961 = vadd.xlane.f32.xlu0 %v960
      %v962 = vpop.xlane.xlu0 %961
      %v963 = vrcp.pop %v941
      %v964 = vrcp.pop %v944
      %v965 = vrcp.pop %v947
      %v966 = vrcp.pop %v950
      %v967 = vrcp.pop %v953
      %v968 = vrcp.pop %v956
      %v969 = vrcp.pop %v959
      %v970 = vrcp.pop %v962
      %v971 = vmul.f32 %v924, %v963
      %v972 = vmul.f32 %v926, %v964
      %v973 = vmul.f32 %v928, %v965
      %v974 = vmul.f32 %v930, %v966
      %v975 = vmul.f32 %v932, %v967
      %v976 = vmul.f32 %v934, %v968
      %v977 = vmul.f32 %v936, %v969
      %v978 = vmul.f32 %v938, %v970
      %v979 = vpack.c.bf16 %v972, %v971
      %v980 = vpack.c.bf16 %v974, %v973
      %v981 = vpack.c.bf16 %v976, %v975
      %v982 = vpack.c.bf16 %v978, %v977
      %983 = vrot.lane.b32.xlu0 %v399, 48
      %v984 = vpop.permute.xlu0 %983
      %985 = vrot.lane.b32.xlu0 %v400, 48
      %v986 = vpop.permute.xlu0 %985
      %987 = vrot.lane.b32.xlu0 %v401, 48
      %v988 = vpop.permute.xlu0 %987
      %989 = vrot.lane.b32.xlu0 %v402, 48
      %v990 = vpop.permute.xlu0 %989
      %v996 = vsel %vm505, %v979, 0
      %v999 = vsel %vm505, %v980, 0
      %v1002 = vsel %vm505, %v981, 0
      %v1005 = vsel %vm505, %v982, 0
      %1007 = vmatprep.subr.bf16.mxu0 0
      %1008 = vmatpush1.bf16.msra.mxu0 %v984
      %1009 = vmatprep.subr.bf16.mxu0 0
      %1010 = vmatpush1.bf16.msra.mxu0 %v986
      %1011 = vmatprep.subr.bf16.mxu0 0
      %1012 = vmatpush1.bf16.msra.mxu0 %v988
      %1013 = vmatprep.subr.bf16.mxu0 0
      %1014 = vmatpush1.bf16.msra.mxu0 %v990
      %1015 = vmatprep.subr.bf16.mxu0 0
      %1016 = vmatpush1.bf16.msra.mxu0 0
      %1017 = vmatprep.subr.bf16.mxu0 0
      %1018 = vmatpush1.bf16.msra.mxu0 0
      %1019 = vmatprep.subr.bf16.mxu0 0
      %1020 = vmatpush1.bf16.msra.mxu0 0
      %1021 = vmatprep.subr.bf16.mxu0 0
      %1022 = vmatpush1.bf16.msra.mxu0 0
      %1023 = vmatprep.subr.bf16.mxu0 0
      %1024 = vmatpush1.bf16.msra.mxu0 0
      %1025 = vmatprep.subr.bf16.mxu0 0
      %1026 = vmatpush1.bf16.msra.mxu0 0
      %1027 = vmatprep.subr.bf16.mxu0 0
      %1028 = vmatpush1.bf16.msra.mxu0 0
      %1029 = vmatprep.subr.bf16.mxu0 0
      %1030 = vmatpush1.bf16.msra.mxu0 0
      %1031 = vmatprep.subr.bf16.mxu0 0
      %1032 = vmatpush1.bf16.msra.mxu0 0
      %1033 = vmatprep.subr.bf16.mxu0 0
      %1034 = vmatpush1.bf16.msra.mxu0 0
      %1035 = vmatprep.subr.bf16.mxu0 0
      %1036 = vmatpush1.bf16.msra.mxu0 0
      %1037 = vmatprep.subr.bf16.mxu0 0
      %1038 = vmatpush1.bf16.msra.mxu0 0
      %1039 = vmatprep.mubr.bf16.mxu0 0
      %1040 = vmatmul.mubr.bf16.gmra.mrb[0].mxu0 %v996
      %v1041 = vpop.f32.mrb[0].mxu0
      %v1042 = vadd.f32 0.0, %v1041
      %v1043 = vpop.f32.mrb[0].mxu0
      %v1044 = vpop.f32.mrb[0].mxu0
      %v1045 = vadd.f32 0.0, %v1044
      %v1046 = vpop.f32.mrb[0].mxu0
      %1047 = vmatprep.mubr.bf16.mxu0 0
      %1048 = vmatmul.mubr.bf16.gmra.mrb[0].mxu0 %v999
      %v1049 = vpop.f32.mrb[0].mxu0
      %v1050 = vadd.f32 0.0, %v1049
      %v1051 = vpop.f32.mrb[0].mxu0
      %v1052 = vpop.f32.mrb[0].mxu0
      %v1053 = vadd.f32 0.0, %v1052
      %v1054 = vpop.f32.mrb[0].mxu0
      %1055 = vmatprep.mubr.bf16.mxu0 0
      %1056 = vmatmul.mubr.bf16.gmra.mrb[0].mxu0 %v1002
      %v1057 = vpop.f32.mrb[0].mxu0
      %v1058 = vadd.f32 0.0, %v1057
      %v1059 = vpop.f32.mrb[0].mxu0
      %v1060 = vpop.f32.mrb[0].mxu0
      %v1061 = vadd.f32 0.0, %v1060
      %v1062 = vpop.f32.mrb[0].mxu0
      %1063 = vmatprep.mubr.bf16.mxu0 0
      %1064 = vmatmul.mubr.bf16.gmra.mrb[0].mxu0 %v1005
      %v1065 = vpop.f32.mrb[0].mxu0
      %v1066 = vadd.f32 0.0, %v1065
      %v1067 = vpop.f32.mrb[0].mxu0
      %v1068 = vpop.f32.mrb[0].mxu0
      %v1069 = vadd.f32 0.0, %v1068
      %v1070 = vpop.f32.mrb[0].mxu0
      %1071 = vdwg.mxu0
      %s1072 = scalar_lea.vmem %s3, 8
      %v1073 = vld [vmem:[%s1072] sm:$0xf]
      %v1074 = vld [vmem:[%s1072 + $0x4] sm:$0xf]
      %v1075 = vpack.c.bf16 %v1045, %v1042
      %v1076 = vpack.c.bf16 %v1053, %v1050
      %v1077 = vpack.c.bf16 %v1061, %v1058
      %v1078 = vpack.c.bf16 %v1069, %v1066
      %v1081 = vunpack.c.l.b16 %v1073
      %v1082 = vunpack.c.l.b16 %v1074
      %v1083 = vpack.c.b16 %v1082, %v1081
      %1085 = vxpose.xlu0.c.b16.start [1/8] %v1083, 128
      %1086 = vxpose.xlu0.c.b16.cont [2/8] 0, 128
      %1087 = vxpose.xlu0.c.b16.cont [3/8] 0, 128
      %1088 = vxpose.xlu0.c.b16.cont [4/8] 0, 128
      %1089 = vxpose.xlu0.c.b16.cont [5/8] 0, 128
      %1090 = vxpose.xlu0.c.b16.cont [6/8] 0, 128
      %1091 = vxpose.xlu0.c.b16.cont [7/8] 0, 128
      %1092 = vxpose.xlu0.c.b16.end [8/8] 0, 128
      %v1093 = vpop.trf.xlu0
      %v1094 = vpop.trf.xlu0
      %v1095 = vpop.trf.xlu0
      %v1096 = vpop.trf.xlu0
      %v1097 = vpop.trf.xlu0
      %v1098 = vpop.trf.xlu0
      %v1099 = vpop.trf.xlu0
      %v1100 = vpop.trf.xlu0
      %v1102 = vsel %vm415, %v1093, 0
      %v1105 = vsel %vm415, %v1094, 0
      %v1108 = vsel %vm415, %v1075, 0
      %v1111 = vsel %vm415, %v1076, 0
      %v1114 = vsel %vm415, %v1077, 0
      %v1117 = vsel %vm415, %v1078, 0
      %1119 = vmatprep.subr.bf16.mxu0 0
      %1120 = vmatpush1.bf16.xpose.msra.mxu0 %v1108
      %1121 = vmatprep.subr.bf16.mxu0 0
      %1122 = vmatpush1.bf16.xpose.msra.mxu0 %v1111
      %1123 = vmatprep.subr.bf16.mxu0 0
      %1124 = vmatpush1.bf16.xpose.msra.mxu0 %v1114
      %1125 = vmatprep.subr.bf16.mxu0 0
      %1126 = vmatpush1.bf16.xpose.msra.mxu0 %v1117
      %1127 = vmatprep.subr.bf16.mxu0 0
      %1128 = vmatpush1.bf16.xpose.msra.mxu0 0
      %1129 = vmatprep.subr.bf16.mxu0 0
      %1130 = vmatpush1.bf16.xpose.msra.mxu0 0
      %1131 = vmatprep.subr.bf16.mxu0 0
      %1132 = vmatpush1.bf16.xpose.msra.mxu0 0
      %1133 = vmatprep.subr.bf16.mxu0 0
      %1134 = vmatpush1.bf16.xpose.msra.mxu0 0
      %1135 = vmatprep.subr.bf16.mxu0 0
      %1136 = vmatpush1.bf16.xpose.msra.mxu0 0
      %1137 = vmatprep.subr.bf16.mxu0 0
      %1138 = vmatpush1.bf16.xpose.msra.mxu0 0
      %1139 = vmatprep.subr.bf16.mxu0 0
      %1140 = vmatpush1.bf16.xpose.msra.mxu0 0
      %1141 = vmatprep.subr.bf16.mxu0 0
      %1142 = vmatpush1.bf16.xpose.msra.mxu0 0
      %1143 = vmatprep.subr.bf16.mxu0 0
      %1144 = vmatpush1.bf16.xpose.msra.mxu0 0
      %1145 = vmatprep.subr.bf16.mxu0 0
      %1146 = vmatpush1.bf16.xpose.msra.mxu0 0
      %1147 = vmatprep.subr.bf16.mxu0 0
      %1148 = vmatpush1.bf16.xpose.msra.mxu0 0
      %1149 = vmatprep.subr.bf16.mxu0 0
      %1150 = vmatpush1.bf16.xpose.msra.mxu0 0
      %1151 = vmatprep.mubr.bf16.mxu0 0
      %1152 = vmatmul.mubr.bf16.gmra.mrb[0].mxu0 %v1102
      %v1153 = vpop.f32.mrb[0].mxu0
      %v1154 = vadd.f32 0.0, %v1153
      %v1155 = vpop.f32.mrb[0].mxu0
      %v1156 = vpop.f32.mrb[0].mxu0
      %v1157 = vadd.f32 0.0, %v1156
      %v1158 = vpop.f32.mrb[0].mxu0
      %1159 = vmatprep.mubr.bf16.mxu0 0
      %1160 = vmatmul.mubr.bf16.gmra.mrb[0].mxu0 %v1105
      %v1161 = vpop.f32.mrb[0].mxu0
      %v1162 = vadd.f32 0.0, %v1161
      %v1163 = vpop.f32.mrb[0].mxu0
      %v1164 = vpop.f32.mrb[0].mxu0
      %v1165 = vadd.f32 0.0, %v1164
      %v1166 = vpop.f32.mrb[0].mxu0
      %1167 = vdwg.mxu0
      %v1168 = vadd.f32 %v782, %v1154
      %v1169 = vadd.f32 %v783, %v1157
      %v1170 = vadd.f32 %v784, %v1162
      %v1171 = vadd.f32 %v785, %v1165
      %1172 = vst.msk [vmem:[%s224] sm:$0xff] %vm505, %v1168
      %1173 = vst.msk [vmem:[%s224 + $0x8] sm:$0xff] %vm505, %v1169
      %1174 = vst.msk [vmem:[%s224 + $0x10] sm:$0xff] %vm505, %v1170
      %1175 = vst.msk [vmem:[%s224 + $0x18] sm:$0xff] %vm505, %v1171
      %p1176 = scmp.lt.s32.totalorder %s16, 1
      %s1177 = scalar_select %p1176, %s16, 1
      %s1178 = smul.addr %s1177, 4
      %s1179 = smul.addr %s1178, 8
      %s1180 = scalar_lea.vmem %s5, %s1179
      // Predicated region
      $region41: #{attention_block.1} parent=39 // pred_check
        %p1181 = pneg %p144
      $region42: #{attention_block.1} parent=39 // pred_check_branch
        %1183 = sbr.rel (%p1181) target = $region44
      $region43: #{attention_block.1} parent=39 // pred_region
        _
      $region44: #{attention_block.1} parent=39 // pred_fallthru
        _
    $region40: #{attention_block.1} parent=5 // pred_fallthru
      _
    %p1184 = scmp.le.s32.totalorder 2, %s11
    // Predicated region
    $region45: #{attention_block.1} parent=5 // pred_check
      %p1185 = pneg %p1184
    $region46: #{attention_block.1} parent=5 // pred_check_branch
      %1187 = sbr.rel (%p1185) target = $region48
    $region47: #{attention_block.1} parent=5 // pred_region
      %s1188 = ssub.s32 %s11, 2
      // Predicated region
      $region49: #{attention_block.1} parent=47 // pred_check
        %p1189 = pneg %p150
      $region50: #{attention_block.1} parent=47 // pred_check_branch
        %1191 = sbr.rel (%p1189) target = $region52
      $region51: #{attention_block.1} parent=47 // pred_region
        %p1192 = scmp.lt.s32.totalorder %s17, 1
        %s1193 = scalar_select %p1192, %s17, 1
        %s1194 = smul.addr %s1193, 4
        %s1195 = smul.addr %s1194, 8
        %s1196 = scalar_lea.vmem %s5, %s1195
      $region52: #{attention_block.1} parent=47 // pred_fallthru
        _
    $region48: #{attention_block.1} parent=5 // pred_fallthru
      _
  $region6: #{attention_block.1} parent=0 // loop_footer
    %s15 = sadd.s32 1, %s11
  $region7: #{attention_block.1} parent=0 // loop_footer_branch
    %10 = sbr.rel target = $region3
  $region8: #{attention_block.1} parent=0 // loop_exit
    _

</llo_original>
